<compile_context>
chip_gen: v7x
topology: tpu7x:2x2x1
jax: 0.10.0
libtpu: 0.0.40
codegen_flags: <defaults>
</compile_context>

<pallas_src>
import functools

import jax
import jax.numpy as jnp
from jax.experimental import pallas as pl
from jax.experimental.pallas import tpu as pltpu

LANE = 128      # vreg lane width
SUBLANE = 8     # vreg sublane width


def _round_up(x, m):
    return ((x + m - 1) // m) * m


# ----------------------------------------------------------------------------
# Single fused kernel: walks all layers, activations stay in vregs/VMEM.
#   refs = (x_ref, w0, b0, w1, b1, ..., wL, bL, alpha_ref, o_ref)
#   x_ref : (TB, K0)            VMEM  (unpadded feature dim)
#   wi    : (Kip, Nip)          VMEM  (pre-transposed (in,out), zero-padded, bf16)
#   bi    : (1, Nip)            VMEM  (zero-padded, f32)
#   alpha : (num_hidden,)       SMEM  (PReLU slopes, one per hidden layer)
#   o_ref : (TB, NLp)           VMEM  (lane-dense padded output)
# ----------------------------------------------------------------------------
def _mlp_kernel(*refs, num_hidden):
    x_ref = refs[0]
    o_ref = refs[-1]
    a_ref = refs[-2]
    wb = refs[1:-2]
    num_layers = len(wb) // 2

    h = x_ref[...]                                 # f32 activations
    for i in range(num_layers):                    # static unroll: shapes differ
        w = wb[2 * i][...]                         # bf16 weight (Kp, Np)
        b = wb[2 * i + 1][...]                     # f32 bias (1, Np)
        # Cast only the MXU operands to the weight dtype; accumulate in f32.
        y = jnp.dot(h.astype(w.dtype), w, preferred_element_type=jnp.float32) + b
        if i < num_hidden:                         # hidden layers get PReLU (f32)
            alpha = a_ref[i]
            y = jnp.where(y > 0.0, y, alpha * y)
        h = y
    o_ref[...] = h.astype(o_ref.dtype)


# ----------------------------------------------------------------------------
# Parameter construction mirroring the PyTorch module:
#   Linear(input_size, n) + PReLU, (l-1) x [Linear(n, n) + PReLU], Linear(n, out)
# PyTorch default init: W, b ~ U(-1/sqrt(fan_in), 1/sqrt(fan_in)); PReLU a=0.25.
# ----------------------------------------------------------------------------
def init_params(key, input_size, output_size, n, l):
    dims = [(input_size, n)] + [(n, n)] * (l - 1) + [(n, output_size)]
    params = []
    for (fan_in, fan_out) in dims:
        key, kw, kb = jax.random.split(key, 3)
        bound = 1.0 / jnp.sqrt(jnp.asarray(fan_in, jnp.float32))
        w = jax.random.uniform(kw, (fan_out, fan_in), jnp.float32, -bound, bound)
        b = jax.random.uniform(kb, (fan_out,), jnp.float32, -bound, bound)
        params.append((w, b))
    prelu_alphas = [jnp.asarray(0.25, jnp.float32) for _ in range(l)]
    return params, prelu_alphas


def prepare_params(params, compute_dtype=jnp.bfloat16):
    """One-time prep: transpose to (in,out), zero-pad feature dims, cast to bf16.

    The first layer keeps its true contraction dim so the input x needs no
    feature padding (block = full array dim satisfies the lane rule)."""
    prepared = []
    for idx, (w, b) in enumerate(params):
        n_out, n_in = w.shape
        k_pad = n_in if idx == 0 else _round_up(n_in, LANE)
        n_pad = _round_up(n_out, LANE)
        w_t = jnp.transpose(w)                                   # (K, N)
        w_p = jnp.pad(w_t, ((0, k_pad - n_in), (0, n_pad - n_out)))
        w_p = w_p.astype(compute_dtype)                          # MXU operand dtype
        b_p = jnp.pad(jnp.reshape(b, (1, n_out)),
                      ((0, 0), (0, n_pad - n_out))).astype(jnp.float32)
        prepared.append((w_p, b_p))
    return prepared


def _choose_batch_tile(B, block_b):
    """Pick (tb, b_pad): >=2 grid steps when there is enough batch (v7x megacore),
    and avoid last-tile padding blowup for B just above a tile boundary."""
    b_pad = _round_up(B, SUBLANE)
    if b_pad >= 2 * SUBLANE:
        n_steps = max(2, pl.cdiv(b_pad, block_b))
    else:
        n_steps = 1
    tb = _round_up(pl.cdiv(b_pad, n_steps), SUBLANE)
    b_pad = _round_up(b_pad, tb)
    return tb, b_pad


def _vmem_limit_bytes(prepared, tb, k_in, n_out_pad):
    """Resident VMEM estimate: single-buffered weights/biases + double-buffered
    x/out tiles + a few live f32 intermediates, with ~30% headroom."""
    wb_bytes = sum(w.size * w.dtype.itemsize + b.size * b.dtype.itemsize
                   for w, b in prepared)
    x_bytes = 2 * tb * k_in * 4
    out_bytes = 2 * tb * n_out_pad * 4
    widest = max(w.shape[1] for w, _ in prepared)
    act_bytes = 4 * tb * widest * 4
    total = int((wb_bytes + x_bytes + out_bytes + act_bytes) * 1.3) + (2 << 20)
    return int(min(max(total, 8 << 20), 96 << 20))


# ----------------------------------------------------------------------------
# Fused forward: one pallas_call for the whole network.
# ----------------------------------------------------------------------------
def mlp_forward(x, prepared_params, prelu_alphas, output_size, block_b=512):
    B, K = x.shape
    n_out_pad = prepared_params[-1][0].shape[1]
    num_hidden = len(prepared_params) - 1

    tb, b_pad = _choose_batch_tile(B, block_b)
    x_p = x if b_pad == B else jnp.pad(x, ((0, b_pad - B), (0, 0)))
    alpha_arr = jnp.asarray(prelu_alphas, dtype=jnp.float32).reshape(num_hidden)

    in_specs = [pl.BlockSpec((tb, K), lambda i: (i, 0))]
    flat_wb = []
    for w_p, b_p in prepared_params:
        kp, npad = w_p.shape
        # Grid-invariant operands: DMA'd once, keep a single VMEM buffer.
        in_specs.append(pl.BlockSpec((kp, npad), lambda i: (0, 0),
                                     pipeline_mode=pl.Buffered(1)))
        in_specs.append(pl.BlockSpec((1, npad), lambda i: (0, 0),
                                     pipeline_mode=pl.Buffered(1)))
        flat_wb.extend([w_p, b_p])
    in_specs.append(pl.BlockSpec(memory_space=pltpu.SMEM))       # PReLU slopes

    flops = 2 * b_pad * sum(w.shape[0] * w.shape[1] for w, _ in prepared_params)
    bytes_accessed = (sum(w.size * w.dtype.itemsize + b.size * b.dtype.itemsize
                          for w, b in prepared_params)
                      + x_p.size * x_p.dtype.itemsize
                      + b_pad * n_out_pad * 4)

    kernel = functools.partial(_mlp_kernel, num_hidden=num_hidden)
    out_p = pl.pallas_call(
        kernel,
        out_shape=jax.ShapeDtypeStruct((b_pad, n_out_pad), jnp.float32),
        grid=(b_pad // tb,),
        in_specs=in_specs,
        out_specs=pl.BlockSpec((tb, n_out_pad), lambda i: (i, 0)),
        compiler_params=pltpu.CompilerParams(
            dimension_semantics=("parallel",),
            vmem_limit_bytes=_vmem_limit_bytes(prepared_params, tb, K, n_out_pad)),
        cost_estimate=pl.CostEstimate(flops=int(flops), transcendentals=0,
                                      bytes_accessed=int(bytes_accessed)),
    )(x_p, *flat_wb, alpha_arr)

    # Slice the logical shape back out (cheap at these sizes).
    return out_p[:B, :output_size]
    # TODO(synk): when n >= ~2048 (f32) / ~2896 (bf16) the whole-network-resident
    # scheme exceeds v7x's scoped VMEM; tile weights over (N, K) with a reduction
    # grid axis ordered last ("parallel","parallel","arbitrary"), a VMEM f32
    # accumulator + pl.when init/finalize, and 256-wide tiles on v6e/v7x.


if __name__ == "__main__":
    input_size, output_size, n, l = 32, 16, 64, 3
    batch = 8

    key = jax.random.PRNGKey(0)
    key, kx = jax.random.split(key)
    x = jax.random.normal(kx, (batch, input_size), dtype=jnp.float32)

    params, prelu_alphas = init_params(key, input_size, output_size, n, l)
    compute_dtype = jnp.bfloat16
    prepared = prepare_params(params, compute_dtype)     # one-time transpose/pad/cast

    out = mlp_forward(x, prepared, prelu_alphas, output_size)
    out = jax.block_until_ready(out)
    assert out.shape == (batch, output_size)

    # Reference 1: same numerics as the kernel (bf16 operands, f32 accumulation).
    ref = x
    for i in range(l):
        w, b = params[i]
        ref = jnp.dot(ref.astype(compute_dtype), w.T.astype(compute_dtype),
                      preferred_element_type=jnp.float32) + b
        ref = jnp.where(ref > 0, ref, prelu_alphas[i] * ref)
    w, b = params[-1]
    ref = jnp.dot(ref.astype(compute_dtype), w.T.astype(compute_dtype),
                  preferred_element_type=jnp.float32) + b
    assert jnp.allclose(out, ref, atol=2e-3, rtol=2e-3)

    # Reference 2: full-f32 spec (the PyTorch module); loose tolerance for bf16 operands.
    ref32 = x
    for i in range(l):
        w, b = params[i]
        ref32 = jnp.dot(ref32, w.T, precision=jax.lax.Precision.HIGHEST) + b
        ref32 = jnp.where(ref32 > 0, ref32, prelu_alphas[i] * ref32)
    w, b = params[-1]
    ref32 = jnp.dot(ref32, w.T, precision=jax.lax.Precision.HIGHEST) + b
    assert jnp.allclose(out, ref32, atol=5e-2, rtol=5e-2)

    print("KERNEL_OK")
</pallas_src>

<mosaic_0001>
module attributes {stable_mosaic.version = 11 : i64} {
  func.func @_mlp_kernel(%arg0: i32, %arg1: memref<8x32xf32, #tpu.memory_space<vmem>>, %arg2: memref<32x128xbf16, #tpu.memory_space<vmem>>, %arg3: memref<1x128xf32, #tpu.memory_space<vmem>>, %arg4: memref<128x128xbf16, #tpu.memory_space<vmem>>, %arg5: memref<1x128xf32, #tpu.memory_space<vmem>>, %arg6: memref<128x128xbf16, #tpu.memory_space<vmem>>, %arg7: memref<1x128xf32, #tpu.memory_space<vmem>>, %arg8: memref<128x128xbf16, #tpu.memory_space<vmem>>, %arg9: memref<1x128xf32, #tpu.memory_space<vmem>>, %arg10: memref<3xf32, #tpu.memory_space<smem>>, %arg11: memref<8x128xf32, #tpu.memory_space<vmem>>) attributes {dimension_semantics = [#tpu.dimension_semantics<parallel>], iteration_bounds = array<i64: 1>, scalar_prefetch = 0 : i64, scratch_operands = 0 : i64, tpu.core_type = #tpu.core_type<tc>, window_params = [{transform_indices = @transform_0, window_bounds = array<i64: 8, 32>}, {pipeline_mode = #tpu.pipeline_mode<synchronous>, transform_indices = @transform_1, window_bounds = array<i64: 32, 128>}, {pipeline_mode = #tpu.pipeline_mode<synchronous>, transform_indices = @transform_2, window_bounds = array<i64: 1, 128>}, {pipeline_mode = #tpu.pipeline_mode<synchronous>, transform_indices = @transform_3, window_bounds = array<i64: 128, 128>}, {pipeline_mode = #tpu.pipeline_mode<synchronous>, transform_indices = @transform_4, window_bounds = array<i64: 1, 128>}, {pipeline_mode = #tpu.pipeline_mode<synchronous>, transform_indices = @transform_5, window_bounds = array<i64: 128, 128>}, {pipeline_mode = #tpu.pipeline_mode<synchronous>, transform_indices = @transform_6, window_bounds = array<i64: 1, 128>}, {pipeline_mode = #tpu.pipeline_mode<synchronous>, transform_indices = @transform_7, window_bounds = array<i64: 128, 128>}, {pipeline_mode = #tpu.pipeline_mode<synchronous>, transform_indices = @transform_8, window_bounds = array<i64: 1, 128>}, {transform_indices = @transform_9, window_bounds = array<i64: 3>}, {transform_indices = @transform_10, window_bounds = array<i64: 8, 128>}]} {
    %c0 = arith.constant 0 : index
    %c0_0 = arith.constant 0 : index
    %0 = vector.load %arg1[%c0, %c0_0] : memref<8x32xf32, #tpu.memory_space<vmem>>, vector<8x32xf32>
    %c0_1 = arith.constant 0 : index
    %c0_2 = arith.constant 0 : index
    %1 = vector.load %arg2[%c0_1, %c0_2] : memref<32x128xbf16, #tpu.memory_space<vmem>>, vector<32x128xbf16>
    %c0_3 = arith.constant 0 : index
    %c0_4 = arith.constant 0 : index
    %2 = vector.load %arg3[%c0_3, %c0_4] : memref<1x128xf32, #tpu.memory_space<vmem>>, vector<1x128xf32>
    %3 = arith.truncf %0 : vector<8x32xf32> to vector<8x32xbf16>
    %cst = arith.constant dense<0.000000e+00> : vector<8x128xf32>
    %4 = tpu.matmul %3, %1, %cst {dimension_numbers = #tpu.dot_dimension_numbers<[1], [0], [0], [1], [0, 0, 1, 1], [], []>} : vector<8x32xbf16>, vector<32x128xbf16>, vector<8x128xf32> -> vector<8x128xf32>
    %5 = vector.broadcast %2 : vector<1x128xf32> to vector<8x128xf32>
    %6 = arith.addf %4, %5 : vector<8x128xf32>
    %c0_5 = arith.constant 0 : index
    %7 = memref.load %arg10[%c0_5] : memref<3xf32, #tpu.memory_space<smem>>
    %cst_6 = arith.constant 0.000000e+00 : f32
    %8 = vector.broadcast %cst_6 : f32 to vector<8x128xf32>
    %9 = arith.cmpf ogt, %6, %8 : vector<8x128xf32>
    %10 = vector.broadcast %7 : f32 to vector<8x128xf32>
    %11 = arith.mulf %10, %6 : vector<8x128xf32>
    %12 = arith.select %9, %6, %11 : vector<8x128xi1>, vector<8x128xf32>
    %c0_7 = arith.constant 0 : index
    %c0_8 = arith.constant 0 : index
    %13 = vector.load %arg4[%c0_7, %c0_8] : memref<128x128xbf16, #tpu.memory_space<vmem>>, vector<128x128xbf16>
    %c0_9 = arith.constant 0 : index
    %c0_10 = arith.constant 0 : index
    %14 = vector.load %arg5[%c0_9, %c0_10] : memref<1x128xf32, #tpu.memory_space<vmem>>, vector<1x128xf32>
    %15 = arith.truncf %12 : vector<8x128xf32> to vector<8x128xbf16>
    %cst_11 = arith.constant dense<0.000000e+00> : vector<8x128xf32>
    %16 = tpu.matmul %15, %13, %cst_11 {dimension_numbers = #tpu.dot_dimension_numbers<[1], [0], [0], [1], [0, 0, 1, 1], [], []>} : vector<8x128xbf16>, vector<128x128xbf16>, vector<8x128xf32> -> vector<8x128xf32>
    %17 = vector.broadcast %14 : vector<1x128xf32> to vector<8x128xf32>
    %18 = arith.addf %16, %17 : vector<8x128xf32>
    %c1 = arith.constant 1 : index
    %19 = memref.load %arg10[%c1] : memref<3xf32, #tpu.memory_space<smem>>
    %cst_12 = arith.constant 0.000000e+00 : f32
    %20 = vector.broadcast %cst_12 : f32 to vector<8x128xf32>
    %21 = arith.cmpf ogt, %18, %20 : vector<8x128xf32>
    %22 = vector.broadcast %19 : f32 to vector<8x128xf32>
    %23 = arith.mulf %22, %18 : vector<8x128xf32>
    %24 = arith.select %21, %18, %23 : vector<8x128xi1>, vector<8x128xf32>
    %c0_13 = arith.constant 0 : index
    %c0_14 = arith.constant 0 : index
    %25 = vector.load %arg6[%c0_13, %c0_14] : memref<128x128xbf16, #tpu.memory_space<vmem>>, vector<128x128xbf16>
    %c0_15 = arith.constant 0 : index
    %c0_16 = arith.constant 0 : index
    %26 = vector.load %arg7[%c0_15, %c0_16] : memref<1x128xf32, #tpu.memory_space<vmem>>, vector<1x128xf32>
    %27 = arith.truncf %24 : vector<8x128xf32> to vector<8x128xbf16>
    %cst_17 = arith.constant dense<0.000000e+00> : vector<8x128xf32>
    %28 = tpu.matmul %27, %25, %cst_17 {dimension_numbers = #tpu.dot_dimension_numbers<[1], [0], [0], [1], [0, 0, 1, 1], [], []>} : vector<8x128xbf16>, vector<128x128xbf16>, vector<8x128xf32> -> vector<8x128xf32>
    %29 = vector.broadcast %26 : vector<1x128xf32> to vector<8x128xf32>
    %30 = arith.addf %28, %29 : vector<8x128xf32>
    %c2 = arith.constant 2 : index
    %31 = memref.load %arg10[%c2] : memref<3xf32, #tpu.memory_space<smem>>
    %cst_18 = arith.constant 0.000000e+00 : f32
    %32 = vector.broadcast %cst_18 : f32 to vector<8x128xf32>
    %33 = arith.cmpf ogt, %30, %32 : vector<8x128xf32>
    %34 = vector.broadcast %31 : f32 to vector<8x128xf32>
    %35 = arith.mulf %34, %30 : vector<8x128xf32>
    %36 = arith.select %33, %30, %35 : vector<8x128xi1>, vector<8x128xf32>
    %c0_19 = arith.constant 0 : index
    %c0_20 = arith.constant 0 : index
    %37 = vector.load %arg8[%c0_19, %c0_20] : memref<128x128xbf16, #tpu.memory_space<vmem>>, vector<128x128xbf16>
    %c0_21 = arith.constant 0 : index
    %c0_22 = arith.constant 0 : index
    %38 = vector.load %arg9[%c0_21, %c0_22] : memref<1x128xf32, #tpu.memory_space<vmem>>, vector<1x128xf32>
    %39 = arith.truncf %36 : vector<8x128xf32> to vector<8x128xbf16>
    %cst_23 = arith.constant dense<0.000000e+00> : vector<8x128xf32>
    %40 = tpu.matmul %39, %37, %cst_23 {dimension_numbers = #tpu.dot_dimension_numbers<[1], [0], [0], [1], [0, 0, 1, 1], [], []>} : vector<8x128xbf16>, vector<128x128xbf16>, vector<8x128xf32> -> vector<8x128xf32>
    %41 = vector.broadcast %38 : vector<1x128xf32> to vector<8x128xf32>
    %42 = arith.addf %40, %41 : vector<8x128xf32>
    %c0_24 = arith.constant 0 : index
    %c0_25 = arith.constant 0 : index
    %43 = vector.load %arg11[%c0_24, %c0_25] : memref<8x128xf32, #tpu.memory_space<vmem>>, vector<8x128xf32>
    tpu.vector_store %arg11[%c0_24, %c0_25], %42 {strides = array<i32>} : memref<8x128xf32, #tpu.memory_space<vmem>>, vector<8x128xf32>,
    return
  }
  func.func @transform_0(%arg0: i32) -> (i32, i32) {
    %c0_i32 = arith.constant 0 : i32
    %c0_i32_0 = arith.constant 0 : i32
    return %arg0, %c0_i32 : i32, i32
  }
  func.func @transform_1(%arg0: i32) -> (i32, i32) {
    %c0_i32 = arith.constant 0 : i32
    %c0_i32_0 = arith.constant 0 : i32
    %c0_i32_1 = arith.constant 0 : i32
    return %c0_i32, %c0_i32_0 : i32, i32
  }
  func.func @transform_2(%arg0: i32) -> (i32, i32) {
    %c0_i32 = arith.constant 0 : i32
    %c0_i32_0 = arith.constant 0 : i32
    %c0_i32_1 = arith.constant 0 : i32
    return %c0_i32, %c0_i32_0 : i32, i32
  }
  func.func @transform_3(%arg0: i32) -> (i32, i32) {
    %c0_i32 = arith.constant 0 : i32
    %c0_i32_0 = arith.constant 0 : i32
    %c0_i32_1 = arith.constant 0 : i32
    return %c0_i32, %c0_i32_0 : i32, i32
  }
  func.func @transform_4(%arg0: i32) -> (i32, i32) {
    %c0_i32 = arith.constant 0 : i32
    %c0_i32_0 = arith.constant 0 : i32
    %c0_i32_1 = arith.constant 0 : i32
    return %c0_i32, %c0_i32_0 : i32, i32
  }
  func.func @transform_5(%arg0: i32) -> (i32, i32) {
    %c0_i32 = arith.constant 0 : i32
    %c0_i32_0 = arith.constant 0 : i32
    %c0_i32_1 = arith.constant 0 : i32
    return %c0_i32, %c0_i32_0 : i32, i32
  }
  func.func @transform_6(%arg0: i32) -> (i32, i32) {
    %c0_i32 = arith.constant 0 : i32
    %c0_i32_0 = arith.constant 0 : i32
    %c0_i32_1 = arith.constant 0 : i32
    return %c0_i32, %c0_i32_0 : i32, i32
  }
  func.func @transform_7(%arg0: i32) -> (i32, i32) {
    %c0_i32 = arith.constant 0 : i32
    %c0_i32_0 = arith.constant 0 : i32
    %c0_i32_1 = arith.constant 0 : i32
    return %c0_i32, %c0_i32_0 : i32, i32
  }
  func.func @transform_8(%arg0: i32) -> (i32, i32) {
    %c0_i32 = arith.constant 0 : i32
    %c0_i32_0 = arith.constant 0 : i32
    %c0_i32_1 = arith.constant 0 : i32
    return %c0_i32, %c0_i32_0 : i32, i32
  }
  func.func @transform_9(%arg0: i32) -> i32 {
    %c0_i32 = arith.constant 0 : i32
    %c0_i32_0 = arith.constant 0 : i32
    return %c0_i32 : i32
  }
  func.func @transform_10(%arg0: i32) -> (i32, i32) {
    %c0_i32 = arith.constant 0 : i32
    %c0_i32_0 = arith.constant 0 : i32
    return %arg0, %c0_i32 : i32, i32
  }
}

</mosaic_0001>

<llo_original>
// kernel: tpu_custom_call.1
$region0: #{tpu_custom_call.1}
  #allocation0 [shape = 'u32[]', space=smem, size = 0x4, offset = 0x4, fixed_abs, tag = 'smem constant byte address 0x4 - core index']
  #allocation1 [shape = 'u32[144,128]{1,0:T(1,128)}', space=vmem, size = 0x12000, scoped, tag = 'internal scratch']
  %s0 = inlined_call_operand.hbm [shape: f32[8,32], index: 0, kind: input, shape index: {}]
  %s1 = inlined_call_operand.hbm [shape: bf16[32,128], index: 1, kind: input, shape index: {}]
  %s2 = inlined_call_operand.vmem [shape: f32[1,128], index: 2, kind: input, shape index: {}]
  %s3 = inlined_call_operand.hbm [shape: bf16[128,128], index: 3, kind: input, shape index: {}]
  %s4 = inlined_call_operand.vmem [shape: f32[1,128], index: 4, kind: input, shape index: {}]
  %s5 = inlined_call_operand.hbm [shape: bf16[128,128], index: 5, kind: input, shape index: {}]
  %s6 = inlined_call_operand.vmem [shape: f32[1,128], index: 6, kind: input, shape index: {}]
  %s7 = inlined_call_operand.hbm [shape: bf16[128,128], index: 7, kind: input, shape index: {}]
  %s8 = inlined_call_operand.vmem [shape: f32[1,128], index: 8, kind: input, shape index: {}]
  %s9 = inlined_call_operand.vmem [shape: f32[3], index: 9, kind: input, shape index: {}]
  %s10 = inlined_call_operand.hbm [shape: f32[8,128], index: 10, kind: output, shape index: {}]
  %s11 = sld [smem:[#allocation0]]
  $region74: #{tpu_custom_call.1} parent=0
    _
  %s13 = ssub.s32 1, %s11
  %s14 = scalar_select 0, %s13, %s11
  $region1: #{tpu_custom_call.1} parent=0
    #allocation2 [shape = 'u8[4096]{0}', space=vmem, size = 0x1000, scoped, tag = 'input window, operand 0, single buffered']
    #allocation3 [shape = 's32[1]{0}', space=sflag, size = 0x4, scoped, tag = 'scoped memory for tpu_custom_call.1']
    #allocation4 [shape = 's32[1]{0}', space=sflag, size = 0x4, scoped, tag = 'scoped memory for tpu_custom_call.1']
    #allocation5 [shape = 's32[1]{0}', space=sflag, size = 0x4, scoped, tag = 'scoped memory for tpu_custom_call.1']
    #allocation6 [shape = 'u8[8192]{0}', space=vmem, size = 0x2000, scoped, tag = 'input window, operand 1, single buffered']
    #allocation7 [shape = 's32[1]{0}', space=sflag, size = 0x4, scoped, tag = 'scoped memory for tpu_custom_call.1']
    #allocation8 [shape = 'u8[32768]{0}', space=vmem, size = 0x8000, scoped, tag = 'input window, operand 3, single buffered']
    #allocation9 [shape = 'u8[32768]{0}', space=vmem, size = 0x8000, scoped, tag = 'input window, operand 5, single buffered']
    #allocation10 [shape = 's32[1]{0}', space=sflag, size = 0x4, scoped, tag = 'scoped memory for tpu_custom_call.1']
    #allocation11 [shape = 'u8[32768]{0}', space=vmem, size = 0x8000, scoped, tag = 'input window, operand 7, single buffered']
    #allocation12 [shape = 'u8[512]{0}', space=smem, size = 0x200, scoped, tag = 'input window, operand 9, single buffered']
    #allocation13 [shape = 'u8[4096]{0}', space=vmem, size = 0x1000, scoped, tag = 'output window, operand 0, single buffered']
    %15 = vsyncpa [#allocation3], 0
    %16 = vsyncpa [#allocation7], 0
    %17 = vsyncpa [#allocation10], 0
    %18 = vsyncpa [#allocation5], 0
    %19 = vsyncpa [#allocation4], 0
    // Predicated region
    $region2: #{tpu_custom_call.1} parent=1 // pred_check
      _
    $region3: #{tpu_custom_call.1} parent=1 // pred_check_branch
      %21 = sbr.rel (0) target = $region5
    $region4: #{tpu_custom_call.1} parent=1 // pred_region
      %s23 = ssub.s32 128, 128
      %24 = vsyncadd [#allocation3], %s23
      %s26 = sshll.u32 [#allocation2], 4
      %s27 = int_to_ptr.vmem [resolvable:$true] %s26
      %29 = dma.hbm_to_vmem [thread:$0]  %s0, 128, %s27, [#allocation3]
    $region5: #{tpu_custom_call.1} parent=1 // pred_fallthru
      _
    // Predicated region
    $region6: #{tpu_custom_call.1} parent=1 // pred_check
      _
    $region7: #{tpu_custom_call.1} parent=1 // pred_check_branch
      %31 = sbr.rel (0) target = $region9
    $region8: #{tpu_custom_call.1} parent=1 // pred_region
      %s33 = ssub.s32 256, 256
      %34 = vsyncadd [#allocation7], %s33
      %s35 = sshll.u32 [#allocation6], 4
      %s36 = int_to_ptr.vmem [resolvable:$true] %s35
      %41 = dma.hbm_to_vmem [thread:$0]  %s1, 256, %s36, [#allocation7], 64, 64, 4
    $region9: #{tpu_custom_call.1} parent=1 // pred_fallthru
      _
    // Predicated region
    $region10: #{tpu_custom_call.1} parent=1 // pred_check
      _
    $region11: #{tpu_custom_call.1} parent=1 // pred_check_branch
      %43 = sbr.rel (0) target = $region13
    $region12: #{tpu_custom_call.1} parent=1 // pred_region
      _
    $region13: #{tpu_custom_call.1} parent=1 // pred_fallthru
      _
    // Predicated region
    $region14: #{tpu_custom_call.1} parent=1 // pred_check
      _
    $region15: #{tpu_custom_call.1} parent=1 // pred_check_branch
      %45 = sbr.rel (0) target = $region17
    $region16: #{tpu_custom_call.1} parent=1 // pred_region
      %s47 = ssub.s32 1024, 1024
      %48 = vsyncadd [#allocation7], %s47
      %s49 = sshll.u32 [#allocation8], 4
      %s50 = int_to_ptr.vmem [resolvable:$true] %s49
      %55 = dma.hbm_to_vmem [thread:$0]  %s3, 1024, %s50, [#allocation7], 64, 64, 4
    $region17: #{tpu_custom_call.1} parent=1 // pred_fallthru
      _
    // Predicated region
    $region18: #{tpu_custom_call.1} parent=1 // pred_check
      _
    $region19: #{tpu_custom_call.1} parent=1 // pred_check_branch
      %57 = sbr.rel (0) target = $region21
    $region20: #{tpu_custom_call.1} parent=1 // pred_region
      _
    $region21: #{tpu_custom_call.1} parent=1 // pred_fallthru
      _
    // Predicated region
    $region22: #{tpu_custom_call.1} parent=1 // pred_check
      _
    $region23: #{tpu_custom_call.1} parent=1 // pred_check_branch
      %59 = sbr.rel (0) target = $region25
    $region24: #{tpu_custom_call.1} parent=1 // pred_region
      %s61 = ssub.s32 1024, 1024
      %62 = vsyncadd [#allocation10], %s61
      %s63 = sshll.u32 [#allocation9], 4
      %s64 = int_to_ptr.vmem [resolvable:$true] %s63
      %69 = dma.hbm_to_vmem [thread:$0]  %s5, 1024, %s64, [#allocation10], 64, 64, 4
    $region25: #{tpu_custom_call.1} parent=1 // pred_fallthru
      _
    // Predicated region
    $region26: #{tpu_custom_call.1} parent=1 // pred_check
      _
    $region27: #{tpu_custom_call.1} parent=1 // pred_check_branch
      %71 = sbr.rel (0) target = $region29
    $region28: #{tpu_custom_call.1} parent=1 // pred_region
      _
    $region29: #{tpu_custom_call.1} parent=1 // pred_fallthru
      _
    // Predicated region
    $region30: #{tpu_custom_call.1} parent=1 // pred_check
      _
    $region31: #{tpu_custom_call.1} parent=1 // pred_check_branch
      %73 = sbr.rel (0) target = $region33
    $region32: #{tpu_custom_call.1} parent=1 // pred_region
      %s75 = ssub.s32 1024, 1024
      %76 = vsyncadd [#allocation10], %s75
      %s77 = sshll.u32 [#allocation11], 4
      %s78 = int_to_ptr.vmem [resolvable:$true] %s77
      %83 = dma.hbm_to_vmem [thread:$0]  %s7, 1024, %s78, [#allocation10], 64, 64, 4
    $region33: #{tpu_custom_call.1} parent=1 // pred_fallthru
      _
    // Predicated region
    $region34: #{tpu_custom_call.1} parent=1 // pred_check
      _
    $region35: #{tpu_custom_call.1} parent=1 // pred_check_branch
      %85 = sbr.rel (0) target = $region37
    $region36: #{tpu_custom_call.1} parent=1 // pred_region
      _
    $region37: #{tpu_custom_call.1} parent=1 // pred_fallthru
      _
    // Predicated region
    $region38: #{tpu_custom_call.1} parent=1 // pred_check
      _
    $region39: #{tpu_custom_call.1} parent=1 // pred_check_branch
      %87 = sbr.rel (0) target = $region41
    $region40: #{tpu_custom_call.1} parent=1 // pred_region
      %s89 = ssub.s32 16, 16
      %90 = vsyncadd [#allocation5], %s89
      %s92 = sshll.u32 %s9, 4
      %s93 = int_to_ptr.vmem [resolvable:$true] %s92
      %95 = dma.vmem_to_smem %s93, 16, [#allocation12], [#allocation5]
    $region41: #{tpu_custom_call.1} parent=1 // pred_fallthru
      _
    // Predicated region
    $region42: #{tpu_custom_call.1} parent=1 // pred_check
      _
    $region43: #{tpu_custom_call.1} parent=1 // pred_check_branch
      %97 = sbr.rel (0) target = $region45
    $region44: #{tpu_custom_call.1} parent=1 // pred_region
      %98 = dma.done [#allocation3], 128
    $region45: #{tpu_custom_call.1} parent=1 // pred_fallthru
      _
    // Predicated region
    $region46: #{tpu_custom_call.1} parent=1 // pred_check
      _
    $region47: #{tpu_custom_call.1} parent=1 // pred_check_branch
      %100 = sbr.rel (0) target = $region49
    $region48: #{tpu_custom_call.1} parent=1 // pred_region
      %101 = dma.done [#allocation7], 256
    $region49: #{tpu_custom_call.1} parent=1 // pred_fallthru
      _
    // Predicated region
    $region50: #{tpu_custom_call.1} parent=1 // pred_check
      _
    $region51: #{tpu_custom_call.1} parent=1 // pred_check_branch
      %103 = sbr.rel (0) target = $region53
    $region52: #{tpu_custom_call.1} parent=1 // pred_region
      %104 = dma.done [#allocation7], 1024
    $region53: #{tpu_custom_call.1} parent=1 // pred_fallthru
      _
    // Predicated region
    $region54: #{tpu_custom_call.1} parent=1 // pred_check
      _
    $region55: #{tpu_custom_call.1} parent=1 // pred_check_branch
      %106 = sbr.rel (0) target = $region57
    $region56: #{tpu_custom_call.1} parent=1 // pred_region
      %107 = dma.done [#allocation10], 1024
    $region57: #{tpu_custom_call.1} parent=1 // pred_fallthru
      _
    // Predicated region
    $region58: #{tpu_custom_call.1} parent=1 // pred_check
      _
    $region59: #{tpu_custom_call.1} parent=1 // pred_check_branch
      %109 = sbr.rel (0) target = $region61
    $region60: #{tpu_custom_call.1} parent=1 // pred_region
      %110 = dma.done [#allocation10], 1024
    $region61: #{tpu_custom_call.1} parent=1 // pred_fallthru
      _
    // Predicated region
    $region62: #{tpu_custom_call.1} parent=1 // pred_check
      _
    $region63: #{tpu_custom_call.1} parent=1 // pred_check_branch
      %112 = sbr.rel (0) target = $region65
    $region64: #{tpu_custom_call.1} parent=1 // pred_region
      %113 = dma.done [#allocation5], 16
    $region65: #{tpu_custom_call.1} parent=1 // pred_fallthru
      _
    %114 = sfence
    %v116 = vld [vmem:[#allocation2] sm:$0xff]
    %v117 = vld [vmem:[#allocation6] sm:$0xf]
    %v118 = vld [vmem:[#allocation6 + $0x4] sm:$0xf]
    %v119 = vld [vmem:[#allocation6 + $0x8] sm:$0xf]
    %v120 = vld [vmem:[#allocation6 + $0xc] sm:$0xf]
    %v121 = vld [vmem:[%s2] sm:$0x1]
    %v122 = vpack.c.bf16 %v116, %v116
    %v124 = vlaneseq
    %v125 = vshrl.u32 %v124, 7
    %v126 = vsub.s32 0, %v125
    %v127 = vrot.slane %v121, %v126
    %v133 = vunpack.c.l.b16 %v117
    %v134 = vunpack.c.l.b16 %v118
    %v135 = vunpack.c.l.b16 %v119
    %v136 = vunpack.c.l.b16 %v120
    %v137 = vpack.c.b16 %v134, %v133
    %v138 = vpack.c.b16 %v136, %v135
    %vm141 = vcmask 261120
    %v143 = vsel %vm141, %v122, 0
    %145 = vmatprep.subr.bf16.mxu0 0
    %146 = vmatpush1.bf16.msra.mxu0 %v137
    %147 = vmatprep.subr.bf16.mxu0 0
    %148 = vmatpush1.bf16.msra.mxu0 %v138
    %149 = vmatprep.subr.bf16.mxu0 0
    %150 = vmatpush1.bf16.msra.mxu0 0
    %151 = vmatprep.subr.bf16.mxu0 0
    %152 = vmatpush1.bf16.msra.mxu0 0
    %153 = vmatprep.subr.bf16.mxu0 0
    %154 = vmatpush1.bf16.msra.mxu0 0
    %155 = vmatprep.subr.bf16.mxu0 0
    %156 = vmatpush1.bf16.msra.mxu0 0
    %157 = vmatprep.subr.bf16.mxu0 0
    %158 = vmatpush1.bf16.msra.mxu0 0
    %159 = vmatprep.subr.bf16.mxu0 0
    %160 = vmatpush1.bf16.msra.mxu0 0
    %161 = vmatprep.subr.bf16.mxu0 0
    %162 = vmatpush1.bf16.msra.mxu0 0
    %163 = vmatprep.subr.bf16.mxu0 0
    %164 = vmatpush1.bf16.msra.mxu0 0
    %165 = vmatprep.subr.bf16.mxu0 0
    %166 = vmatpush1.bf16.msra.mxu0 0
    %167 = vmatprep.subr.bf16.mxu0 0
    %168 = vmatpush1.bf16.msra.mxu0 0
    %169 = vmatprep.subr.bf16.mxu0 0
    %170 = vmatpush1.bf16.msra.mxu0 0
    %171 = vmatprep.subr.bf16.mxu0 0
    %172 = vmatpush1.bf16.msra.mxu0 0
    %173 = vmatprep.subr.bf16.mxu0 0
    %174 = vmatpush1.bf16.msra.mxu0 0
    %175 = vmatprep.subr.bf16.mxu0 0
    %176 = vmatpush1.bf16.msra.mxu0 0
    %177 = vmatprep.mubr.bf16.mxu0 0
    %178 = vmatmul.mubr.bf16.gmra.mrb[0].mxu0 %v143
    %v179 = vpop.f32.mrb[0].mxu0
    %v180 = vadd.f32 %v127, %v179
    %v181 = vpop.f32.mrb[0].mxu0
    %v182 = vpop.f32.mrb[0].mxu0
    %v183 = vpop.f32.mrb[0].mxu0
    %184 = vdwg.mxu0
    %s185 = sld [smem:[#allocation12]]
    %vm186 = vcmp.gt.f32.partialorder %v180, 0.0
    %v187 = vstv %s185
    %v188 = vmul.f32 %v187, %v180
    %v189 = vsel %vm186, %v180, %v188
    %v190 = vld [vmem:[#allocation8] sm:$0xf]
    %v191 = vld [vmem:[#allocation8 + $0x4] sm:$0xf]
    %v192 = vld [vmem:[#allocation8 + $0x8] sm:$0xf]
    %v193 = vld [vmem:[#allocation8 + $0xc] sm:$0xf]
    %v194 = vld [vmem:[#allocation8 + $0x10] sm:$0xf]
    %v195 = vld [vmem:[#allocation8 + $0x14] sm:$0xf]
    %v196 = vld [vmem:[#allocation8 + $0x18] sm:$0xf]
    %v197 = vld [vmem:[#allocation8 + $0x1c] sm:$0xf]
    %v198 = vld [vmem:[#allocation8 + $0x20] sm:$0xf]
    %v199 = vld [vmem:[#allocation8 + $0x24] sm:$0xf]
    %v200 = vld [vmem:[#allocation8 + $0x28] sm:$0xf]
    %v201 = vld [vmem:[#allocation8 + $0x2c] sm:$0xf]
    %v202 = vld [vmem:[#allocation8 + $0x30] sm:$0xf]
    %v203 = vld [vmem:[#allocation8 + $0x34] sm:$0xf]
    %v204 = vld [vmem:[#allocation8 + $0x38] sm:$0xf]
    %v205 = vld [vmem:[#allocation8 + $0x3c] sm:$0xf]
    %v206 = vld [vmem:[%s4] sm:$0x1]
    %v207 = vpack.c.bf16 %v189, %v189
    %v209 = vlaneseq
    %v210 = vshrl.u32 %v209, 7
    %v211 = vsub.s32 0, %v210
    %v212 = vrot.slane %v206, %v211
    %v230 = vunpack.c.l.b16 %v190
    %v231 = vunpack.c.l.b16 %v191
    %v232 = vunpack.c.l.b16 %v192
    %v233 = vunpack.c.l.b16 %v193
    %v234 = vunpack.c.l.b16 %v194
    %v235 = vunpack.c.l.b16 %v195
    %v236 = vunpack.c.l.b16 %v196
    %v237 = vunpack.c.l.b16 %v197
    %v238 = vunpack.c.l.b16 %v198
    %v239 = vunpack.c.l.b16 %v199
    %v240 = vunpack.c.l.b16 %v200
    %v241 = vunpack.c.l.b16 %v201
    %v242 = vunpack.c.l.b16 %v202
    %v243 = vunpack.c.l.b16 %v203
    %v244 = vunpack.c.l.b16 %v204
    %v245 = vunpack.c.l.b16 %v205
    %v246 = vpack.c.b16 %v231, %v230
    %v247 = vpack.c.b16 %v233, %v232
    %v248 = vpack.c.b16 %v235, %v234
    %v249 = vpack.c.b16 %v237, %v236
    %v250 = vpack.c.b16 %v239, %v238
    %v251 = vpack.c.b16 %v241, %v240
    %v252 = vpack.c.b16 %v243, %v242
    %v253 = vpack.c.b16 %v245, %v244
    %262 = vmatprep.subr.bf16.mxu0 0
    %263 = vmatpush1.bf16.msra.mxu0 %v246
    %264 = vmatprep.subr.bf16.mxu0 0
    %265 = vmatpush1.bf16.msra.mxu0 %v247
    %266 = vmatprep.subr.bf16.mxu0 0
    %267 = vmatpush1.bf16.msra.mxu0 %v248
    %268 = vmatprep.subr.bf16.mxu0 0
    %269 = vmatpush1.bf16.msra.mxu0 %v249
    %270 = vmatprep.subr.bf16.mxu0 0
    %271 = vmatpush1.bf16.msra.mxu0 %v250
    %272 = vmatprep.subr.bf16.mxu0 0
    %273 = vmatpush1.bf16.msra.mxu0 %v251
    %274 = vmatprep.subr.bf16.mxu0 0
    %275 = vmatpush1.bf16.msra.mxu0 %v252
    %276 = vmatprep.subr.bf16.mxu0 0
    %277 = vmatpush1.bf16.msra.mxu0 %v253
    %278 = vmatprep.subr.bf16.mxu0 0
    %279 = vmatpush1.bf16.msra.mxu0 0
    %280 = vmatprep.subr.bf16.mxu0 0
    %281 = vmatpush1.bf16.msra.mxu0 0
    %282 = vmatprep.subr.bf16.mxu0 0
    %283 = vmatpush1.bf16.msra.mxu0 0
    %284 = vmatprep.subr.bf16.mxu0 0
    %285 = vmatpush1.bf16.msra.mxu0 0
    %286 = vmatprep.subr.bf16.mxu0 0
    %287 = vmatpush1.bf16.msra.mxu0 0
    %288 = vmatprep.subr.bf16.mxu0 0
    %289 = vmatpush1.bf16.msra.mxu0 0
    %290 = vmatprep.subr.bf16.mxu0 0
    %291 = vmatpush1.bf16.msra.mxu0 0
    %292 = vmatprep.subr.bf16.mxu0 0
    %293 = vmatpush1.bf16.msra.mxu0 0
    %294 = vmatprep.mubr.bf16.mxu0 0
    %295 = vmatmul.mubr.bf16.gmra.mrb[0].mxu0 %v207
    %v296 = vpop.f32.mrb[0].mxu0
    %v297 = vadd.f32 %v212, %v296
    %v298 = vpop.f32.mrb[0].mxu0
    %v299 = vpop.f32.mrb[0].mxu0
    %v300 = vpop.f32.mrb[0].mxu0
    %301 = vdwg.mxu0
    %s302 = sld [smem:[#allocation12 + $0x1]]
    %vm303 = vcmp.gt.f32.partialorder %v297, 0.0
    %v304 = vstv %s302
    %v305 = vmul.f32 %v304, %v297
    %v306 = vsel %vm303, %v297, %v305
    %v307 = vld [vmem:[#allocation9] sm:$0xf]
    %v308 = vld [vmem:[#allocation9 + $0x4] sm:$0xf]
    %v309 = vld [vmem:[#allocation9 + $0x8] sm:$0xf]
    %v310 = vld [vmem:[#allocation9 + $0xc] sm:$0xf]
    %v311 = vld [vmem:[#allocation9 + $0x10] sm:$0xf]
    %v312 = vld [vmem:[#allocation9 + $0x14] sm:$0xf]
    %v313 = vld [vmem:[#allocation9 + $0x18] sm:$0xf]
    %v314 = vld [vmem:[#allocation9 + $0x1c] sm:$0xf]
    %v315 = vld [vmem:[#allocation9 + $0x20] sm:$0xf]
    %v316 = vld [vmem:[#allocation9 + $0x24] sm:$0xf]
    %v317 = vld [vmem:[#allocation9 + $0x28] sm:$0xf]
    %v318 = vld [vmem:[#allocation9 + $0x2c] sm:$0xf]
    %v319 = vld [vmem:[#allocation9 + $0x30] sm:$0xf]
    %v320 = vld [vmem:[#allocation9 + $0x34] sm:$0xf]
    %v321 = vld [vmem:[#allocation9 + $0x38] sm:$0xf]
    %v322 = vld [vmem:[#allocation9 + $0x3c] sm:$0xf]
    %v323 = vld [vmem:[%s6] sm:$0x1]
    %v324 = vpack.c.bf16 %v306, %v306
    %v326 = vlaneseq
    %v327 = vshrl.u32 %v326, 7
    %v328 = vsub.s32 0, %v327
    %v329 = vrot.slane %v323, %v328
    %v347 = vunpack.c.l.b16 %v307
    %v348 = vunpack.c.l.b16 %v308
    %v349 = vunpack.c.l.b16 %v309
    %v350 = vunpack.c.l.b16 %v310
    %v351 = vunpack.c.l.b16 %v311
    %v352 = vunpack.c.l.b16 %v312
    %v353 = vunpack.c.l.b16 %v313
    %v354 = vunpack.c.l.b16 %v314
    %v355 = vunpack.c.l.b16 %v315
    %v356 = vunpack.c.l.b16 %v316
    %v357 = vunpack.c.l.b16 %v317
    %v358 = vunpack.c.l.b16 %v318
    %v359 = vunpack.c.l.b16 %v319
    %v360 = vunpack.c.l.b16 %v320
    %v361 = vunpack.c.l.b16 %v321
    %v362 = vunpack.c.l.b16 %v322
    %v363 = vpack.c.b16 %v348, %v347
    %v364 = vpack.c.b16 %v350, %v349
    %v365 = vpack.c.b16 %v352, %v351
    %v366 = vpack.c.b16 %v354, %v353
    %v367 = vpack.c.b16 %v356, %v355
    %v368 = vpack.c.b16 %v358, %v357
    %v369 = vpack.c.b16 %v360, %v359
    %v370 = vpack.c.b16 %v362, %v361
    %379 = vmatprep.subr.bf16.mxu0 0
    %380 = vmatpush1.bf16.msra.mxu0 %v363
    %381 = vmatprep.subr.bf16.mxu0 0
    %382 = vmatpush1.bf16.msra.mxu0 %v364
    %383 = vmatprep.subr.bf16.mxu0 0
    %384 = vmatpush1.bf16.msra.mxu0 %v365
    %385 = vmatprep.subr.bf16.mxu0 0
    %386 = vmatpush1.bf16.msra.mxu0 %v366
    %387 = vmatprep.subr.bf16.mxu0 0
    %388 = vmatpush1.bf16.msra.mxu0 %v367
    %389 = vmatprep.subr.bf16.mxu0 0
    %390 = vmatpush1.bf16.msra.mxu0 %v368
    %391 = vmatprep.subr.bf16.mxu0 0
    %392 = vmatpush1.bf16.msra.mxu0 %v369
    %393 = vmatprep.subr.bf16.mxu0 0
    %394 = vmatpush1.bf16.msra.mxu0 %v370
    %395 = vmatprep.subr.bf16.mxu0 0
    %396 = vmatpush1.bf16.msra.mxu0 0
    %397 = vmatprep.subr.bf16.mxu0 0
    %398 = vmatpush1.bf16.msra.mxu0 0
    %399 = vmatprep.subr.bf16.mxu0 0
    %400 = vmatpush1.bf16.msra.mxu0 0
    %401 = vmatprep.subr.bf16.mxu0 0
    %402 = vmatpush1.bf16.msra.mxu0 0
    %403 = vmatprep.subr.bf16.mxu0 0
    %404 = vmatpush1.bf16.msra.mxu0 0
    %405 = vmatprep.subr.bf16.mxu0 0
    %406 = vmatpush1.bf16.msra.mxu0 0
    %407 = vmatprep.subr.bf16.mxu0 0
    %408 = vmatpush1.bf16.msra.mxu0 0
    %409 = vmatprep.subr.bf16.mxu0 0
    %410 = vmatpush1.bf16.msra.mxu0 0
    %411 = vmatprep.mubr.bf16.mxu0 0
    %412 = vmatmul.mubr.bf16.gmra.mrb[0].mxu0 %v324
    %v413 = vpop.f32.mrb[0].mxu0
    %v414 = vadd.f32 %v329, %v413
    %v415 = vpop.f32.mrb[0].mxu0
    %v416 = vpop.f32.mrb[0].mxu0
    %v417 = vpop.f32.mrb[0].mxu0
    %418 = vdwg.mxu0
    %s419 = sld [smem:[#allocation12 + $0x2]]
    %vm420 = vcmp.gt.f32.partialorder %v414, 0.0
    %v421 = vstv %s419
    %v422 = vmul.f32 %v421, %v414
    %v423 = vsel %vm420, %v414, %v422
    %v424 = vld [vmem:[#allocation11] sm:$0xf]
    %v425 = vld [vmem:[#allocation11 + $0x4] sm:$0xf]
    %v426 = vld [vmem:[#allocation11 + $0x8] sm:$0xf]
    %v427 = vld [vmem:[#allocation11 + $0xc] sm:$0xf]
    %v428 = vld [vmem:[#allocation11 + $0x10] sm:$0xf]
    %v429 = vld [vmem:[#allocation11 + $0x14] sm:$0xf]
    %v430 = vld [vmem:[#allocation11 + $0x18] sm:$0xf]
    %v431 = vld [vmem:[#allocation11 + $0x1c] sm:$0xf]
    %v432 = vld [vmem:[#allocation11 + $0x20] sm:$0xf]
    %v433 = vld [vmem:[#allocation11 + $0x24] sm:$0xf]
    %v434 = vld [vmem:[#allocation11 + $0x28] sm:$0xf]
    %v435 = vld [vmem:[#allocation11 + $0x2c] sm:$0xf]
    %v436 = vld [vmem:[#allocation11 + $0x30] sm:$0xf]
    %v437 = vld [vmem:[#allocation11 + $0x34] sm:$0xf]
    %v438 = vld [vmem:[#allocation11 + $0x38] sm:$0xf]
    %v439 = vld [vmem:[#allocation11 + $0x3c] sm:$0xf]
    %v440 = vld [vmem:[%s8] sm:$0x1]
    %v441 = vpack.c.bf16 %v423, %v423
    %v443 = vlaneseq
    %v444 = vshrl.u32 %v443, 7
    %v445 = vsub.s32 0, %v444
    %v446 = vrot.slane %v440, %v445
    %v464 = vunpack.c.l.b16 %v424
    %v465 = vunpack.c.l.b16 %v425
    %v466 = vunpack.c.l.b16 %v426
    %v467 = vunpack.c.l.b16 %v427
    %v468 = vunpack.c.l.b16 %v428
    %v469 = vunpack.c.l.b16 %v429
    %v470 = vunpack.c.l.b16 %v430
    %v471 = vunpack.c.l.b16 %v431
    %v472 = vunpack.c.l.b16 %v432
    %v473 = vunpack.c.l.b16 %v433
    %v474 = vunpack.c.l.b16 %v434
    %v475 = vunpack.c.l.b16 %v435
    %v476 = vunpack.c.l.b16 %v436
    %v477 = vunpack.c.l.b16 %v437
    %v478 = vunpack.c.l.b16 %v438
    %v479 = vunpack.c.l.b16 %v439
    %v480 = vpack.c.b16 %v465, %v464
    %v481 = vpack.c.b16 %v467, %v466
    %v482 = vpack.c.b16 %v469, %v468
    %v483 = vpack.c.b16 %v471, %v470
    %v484 = vpack.c.b16 %v473, %v472
    %v485 = vpack.c.b16 %v475, %v474
    %v486 = vpack.c.b16 %v477, %v476
    %v487 = vpack.c.b16 %v479, %v478
    %496 = vmatprep.subr.bf16.mxu0 0
    %497 = vmatpush1.bf16.msra.mxu0 %v480
    %498 = vmatprep.subr.bf16.mxu0 0
    %499 = vmatpush1.bf16.msra.mxu0 %v481
    %500 = vmatprep.subr.bf16.mxu0 0
    %501 = vmatpush1.bf16.msra.mxu0 %v482
    %502 = vmatprep.subr.bf16.mxu0 0
    %503 = vmatpush1.bf16.msra.mxu0 %v483
    %504 = vmatprep.subr.bf16.mxu0 0
    %505 = vmatpush1.bf16.msra.mxu0 %v484
    %506 = vmatprep.subr.bf16.mxu0 0
    %507 = vmatpush1.bf16.msra.mxu0 %v485
    %508 = vmatprep.subr.bf16.mxu0 0
    %509 = vmatpush1.bf16.msra.mxu0 %v486
    %510 = vmatprep.subr.bf16.mxu0 0
    %511 = vmatpush1.bf16.msra.mxu0 %v487
    %512 = vmatprep.subr.bf16.mxu0 0
    %513 = vmatpush1.bf16.msra.mxu0 0
    %514 = vmatprep.subr.bf16.mxu0 0
    %515 = vmatpush1.bf16.msra.mxu0 0
    %516 = vmatprep.subr.bf16.mxu0 0
    %517 = vmatpush1.bf16.msra.mxu0 0
    %518 = vmatprep.subr.bf16.mxu0 0
    %519 = vmatpush1.bf16.msra.mxu0 0
    %520 = vmatprep.subr.bf16.mxu0 0
    %521 = vmatpush1.bf16.msra.mxu0 0
    %522 = vmatprep.subr.bf16.mxu0 0
    %523 = vmatpush1.bf16.msra.mxu0 0
    %524 = vmatprep.subr.bf16.mxu0 0
    %525 = vmatpush1.bf16.msra.mxu0 0
    %526 = vmatprep.subr.bf16.mxu0 0
    %527 = vmatpush1.bf16.msra.mxu0 0
    %528 = vmatprep.mubr.bf16.mxu0 0
    %529 = vmatmul.mubr.bf16.gmra.mrb[0].mxu0 %v441
    %v530 = vpop.f32.mrb[0].mxu0
    %v531 = vadd.f32 %v446, %v530
    %v532 = vpop.f32.mrb[0].mxu0
    %v533 = vpop.f32.mrb[0].mxu0
    %v534 = vpop.f32.mrb[0].mxu0
    %535 = vdwg.mxu0
    %536 = vst [vmem:[#allocation13] sm:$0xff] %v531
    // Predicated region
    $region66: #{tpu_custom_call.1} parent=1 // pred_check
      _
    $region67: #{tpu_custom_call.1} parent=1 // pred_check_branch
      %538 = sbr.rel (0) target = $region69
    $region68: #{tpu_custom_call.1} parent=1 // pred_region
      %s540 = ssub.s32 128, 128
      %541 = vsyncadd [#allocation4], %s540
      %s543 = sshll.u32 [#allocation13], 4
      %s544 = int_to_ptr.vmem [resolvable:$true] %s543
      %546 = dma.vmem_to_hbm [thread:$0]  %s544, 128, %s10, [#allocation4]
    $region69: #{tpu_custom_call.1} parent=1 // pred_fallthru
      _
    // Predicated region
    $region70: #{tpu_custom_call.1} parent=1 // pred_check
      _
    $region71: #{tpu_custom_call.1} parent=1 // pred_check_branch
      %548 = sbr.rel (0) target = $region73
    $region72: #{tpu_custom_call.1} parent=1 // pred_region
      %549 = dma.done [#allocation4], 128
    $region73: #{tpu_custom_call.1} parent=1 // pred_fallthru
      _
    %550 = vsyncpa [#allocation3], 1
    %551 = vsyncpa [#allocation7], 1
    %552 = vsyncpa [#allocation10], 1
    %553 = vsyncpa [#allocation4], 1
    %554 = vsyncpa [#allocation5], 1

</llo_original>
